<compile_context>
chip_gen: v7x
topology: tpu7x:2x2x1
jax: 0.10.0
libtpu: 0.0.40
codegen_flags: <defaults>
</compile_context>

<pallas_src>
import jax
import jax.numpy as jnp
from jax.experimental import pallas as pl
from jax.experimental.pallas import tpu as pltpu

_LANES = 128
_SUBLANES = 8
_TILE_BYTES = 4 << 20            # ~4 MiB per input tile (Pallas double-buffers)
_VMEM_LIMIT = 32 * 1024 * 1024   # safe scoped-VMEM budget on v5e/v6e/v7x
_FALLBACK_BYTES = 8 << 20        # sublane-reduce path bail-out threshold


def _cdiv(a, b):
    return -(-a // b)


def _round_up(a, b):
    return _cdiv(a, b) * b


def _pick_block(total, target, align):
    """Block size (multiple of `align`, close to `target`) + padded extent.

    Keeps padding waste below ~one `align` unit per grid step."""
    target = max(align, (int(target) // align) * align)
    if target >= total:
        return total, total                      # single full block, no padding
    nblocks = _cdiv(total, target)
    block = _round_up(_cdiv(total, nblocks), align)
    return block, _round_up(total, block)


def _params(*sem):
    return pltpu.CompilerParams(dimension_semantics=sem,
                                vmem_limit_bytes=_VMEM_LIMIT)


# --------------------------------------------------------------------------
# Kernel 1: argmax along the lane (last) axis of a (block_rows, N) tile.
# --------------------------------------------------------------------------
def _argmax_lane_kernel(x_ref, out_ref):
    x = x_ref[...]                                               # (rows, N)
    n = x.shape[-1]
    row_max = jnp.max(x, axis=-1, keepdims=True)                 # (rows, 1)
    lane = jax.lax.broadcasted_iota(jnp.int32, x.shape, 1)
    masked = jnp.where(x == row_max, lane, jnp.int32(n))
    out_ref[...] = jnp.min(masked, axis=-1, keepdims=True)       # first max


# --------------------------------------------------------------------------
# Kernel 2: argmax along the sublane (middle) axis of a (1, N, cols) tile.
# Output (1, 1, cols) is lane-dense -> unmasked stores.
# --------------------------------------------------------------------------
def _argmax_sublane_kernel(x_ref, out_ref):
    x = x_ref[...]                                               # (1, N, cols)
    n = x.shape[1]
    col_max = jnp.max(x, axis=1, keepdims=True)                  # (1, 1, cols)
    row = jax.lax.broadcasted_iota(jnp.int32, x.shape, 1)
    masked = jnp.where(x == col_max, row, jnp.int32(n))
    out_ref[...] = jnp.min(masked, axis=1, keepdims=True)        # first max


# --------------------------------------------------------------------------
# Kernel 3: global argmax over a (rows, 128) tile stream.  Per-lane running
# (value, flat index) accumulators; the cross-lane reduce happens only once,
# on the last grid step.
# --------------------------------------------------------------------------
def _argmax_flat_kernel(x_ref, out_ref, best_val, best_idx):
    step = pl.program_id(0)
    x = x_ref[...].astype(best_val.dtype)                        # (rows, 128)
    rows = x.shape[0]

    lane_max = jnp.max(x, axis=0, keepdims=True)                 # (1, 128)
    r = jax.lax.broadcasted_iota(jnp.int32, x.shape, 0)
    first_r = jnp.min(jnp.where(x == lane_max, r, jnp.int32(rows)),
                      axis=0, keepdims=True)                     # (1, 128)
    lane = jax.lax.broadcasted_iota(jnp.int32, (1, _LANES), 1)
    lane_idx = (step * rows + first_r) * _LANES + lane           # global flat idx

    @pl.when(step == 0)
    def _():
        best_val[...] = lane_max
        best_idx[...] = lane_idx

    @pl.when(step > 0)
    def _():
        improved = lane_max > best_val[...]       # strict: first occurrence wins
        best_val[...] = jnp.where(improved, lane_max, best_val[...])
        best_idx[...] = jnp.where(improved, lane_idx, best_idx[...])

    @pl.when(step == pl.num_programs(0) - 1)
    def _():
        bv = best_val[...]
        gmax = jnp.max(bv, axis=1, keepdims=True)                # (1, 1)
        sentinel = jnp.int32(jnp.iinfo(jnp.int32).max)
        cand = jnp.where(bv == gmax, best_idx[...], sentinel)
        out_ref[...] = jnp.min(cand, axis=1, keepdims=True)      # (1, 1)


# --------------------------------------------------------------------------
# Wrappers
# --------------------------------------------------------------------------
def _argmax_last_axis_2d(x2d, block_rows=None):
    M, N = (int(d) for d in x2d.shape)
    if block_rows is None:
        block_rows = min(4096, _TILE_BYTES // max(1, N * x2d.dtype.itemsize))
    block_rows, m_pad = _pick_block(M, block_rows, _SUBLANES)
    xp = x2d if m_pad == M else jnp.pad(x2d, ((0, m_pad - M), (0, 0)))

    out = pl.pallas_call(
        _argmax_lane_kernel,
        out_shape=jax.ShapeDtypeStruct((m_pad, 1), jnp.int32),
        grid=(m_pad // block_rows,),
        in_specs=[pl.BlockSpec((block_rows, N), lambda i: (i, 0))],
        out_specs=pl.BlockSpec((block_rows, 1), lambda i: (i, 0)),
        compiler_params=_params("parallel"),
    )(xp)
    return out[:M, 0]


def _argmax_mid_axis_3d(x3d, block_cols=None):
    A, N, B = (int(d) for d in x3d.shape)
    if block_cols is None:
        block_cols = _TILE_BYTES // max(1, N * x3d.dtype.itemsize)
    block_cols, b_pad = _pick_block(B, block_cols, _LANES)
    xp = x3d if b_pad == B else jnp.pad(x3d, ((0, 0), (0, 0), (0, b_pad - B)))

    out = pl.pallas_call(
        _argmax_sublane_kernel,
        out_shape=jax.ShapeDtypeStruct((A, 1, b_pad), jnp.int32),
        grid=(A, b_pad // block_cols),
        in_specs=[pl.BlockSpec((1, N, block_cols), lambda a, j: (a, 0, j))],
        out_specs=pl.BlockSpec((1, 1, block_cols), lambda a, j: (a, 0, j)),
        compiler_params=_params("parallel", "parallel"),
    )(xp)
    return out[:, 0, :B]


def _argmax_flat(x, block_rows=None):
    flat = x.reshape(-1)
    T = int(flat.shape[0])
    R = _cdiv(T, _LANES)
    if block_rows is None:
        block_rows = _TILE_BYTES // (_LANES * flat.dtype.itemsize)
    block_rows, r_pad = _pick_block(R, block_rows, _SUBLANES)

    if jnp.issubdtype(flat.dtype, jnp.floating):
        pad_val = jnp.array(-jnp.inf, flat.dtype)
        acc_dtype = jnp.float32             # exact for f32 / bf16 / f16 values
    else:
        pad_val = jnp.array(jnp.iinfo(flat.dtype).min, flat.dtype)
        acc_dtype = jnp.int32
    pad_len = r_pad * _LANES - T
    if pad_len:
        flat = jnp.concatenate([flat, jnp.full((pad_len,), pad_val, flat.dtype)])
    x2d = flat.reshape(r_pad, _LANES)

    out = pl.pallas_call(
        _argmax_flat_kernel,
        out_shape=jax.ShapeDtypeStruct((1, 1), jnp.int32),
        grid=(r_pad // block_rows,),
        in_specs=[pl.BlockSpec((block_rows, _LANES), lambda i: (i, 0))],
        out_specs=pl.BlockSpec((1, 1), lambda i: (0, 0)),
        scratch_shapes=[pltpu.VMEM((1, _LANES), acc_dtype),
                        pltpu.VMEM((1, _LANES), jnp.int32)],
        compiler_params=_params("arbitrary"),
    )(x2d)
    return out[0, 0]


def argmax_pallas(x, dim=None, *, block_rows=None, block_cols=None):
    """Equivalent of ArgMax(dim).forward(x); indices returned as int32."""
    if x.dtype == jnp.bool_:
        x = x.astype(jnp.int32)
    if dim is None:
        return _argmax_flat(x, block_rows=block_rows)

    axis = dim % x.ndim
    shape = tuple(int(d) for d in x.shape)
    out_shape = shape[:axis] + shape[axis + 1:]
    N = shape[axis]

    if axis == x.ndim - 1:
        M = 1
        for d in out_shape:
            M *= d
        res = _argmax_last_axis_2d(x.reshape(M, N), block_rows=block_rows)
        return res.reshape(out_shape)

    A = 1
    for d in shape[:axis]:
        A *= d
    B = 1
    for d in shape[axis + 1:]:
        B *= d

    # Preferred path: reduce over the sublane axis, trailing dims on lanes
    # (no HBM transpose, lane-dense output).  Fall back to transpose +
    # lane-reduce only if a minimal (N, 128) column tile cannot fit in VMEM.
    if N * min(B, _LANES) * x.dtype.itemsize > _FALLBACK_BYTES:
        xm = jnp.moveaxis(x, axis, -1)
        res = _argmax_last_axis_2d(xm.reshape(A * B, N), block_rows=block_rows)
        return res.reshape(out_shape)

    res = _argmax_mid_axis_3d(x.reshape(A, N, B), block_cols=block_cols)
    return res.reshape(out_shape)


if __name__ == "__main__":
    key = jax.random.PRNGKey(0)
    k0, k1, k2 = jax.random.split(key, 3)

    # Small NCHW-like activation, consistent with the module's typical usage.
    x = jax.random.normal(k0, (2, 4, 16, 16), dtype=jnp.float32)

    out_dim1 = argmax_pallas(x, dim=1)      # class axis   -> (2, 16, 16)
    out_dim2 = argmax_pallas(x, dim=2)      # spatial axis -> (2, 4, 16)
    out_last = argmax_pallas(x, dim=-1)     # last axis    -> (2, 4, 16)
    out_none = argmax_pallas(x, dim=None)   # global flat  -> scalar
    jax.block_until_ready((out_dim1, out_dim2, out_last, out_none))

    assert out_dim1.shape == (2, 16, 16)
    assert bool(jnp.all(out_dim1 == jnp.argmax(x, axis=1).astype(jnp.int32)))
    assert bool(jnp.all(out_dim2 == jnp.argmax(x, axis=2).astype(jnp.int32)))
    assert bool(jnp.all(out_last == jnp.argmax(x, axis=-1).astype(jnp.int32)))
    assert int(out_none) == int(jnp.argmax(x))

    # Non-multiple-of-8/128 shapes + forced small tiles: exercises multi-block
    # grids, padding, and the running-accumulator path.
    x2 = jax.random.normal(k1, (64, 33), dtype=jnp.float32)
    got_rows = argmax_pallas(x2, dim=1, block_rows=8)
    got_cols = argmax_pallas(x2, dim=0)
    got_flat = argmax_pallas(x2, dim=None, block_rows=8)
    jax.block_until_ready((got_rows, got_cols, got_flat))
    assert bool(jnp.all(got_rows == jnp.argmax(x2, axis=1).astype(jnp.int32)))
    assert bool(jnp.all(got_cols == jnp.argmax(x2, axis=0).astype(jnp.int32)))
    assert int(got_flat) == int(jnp.argmax(x2))

    # Multi-tile lane axis with column padding in the sublane-reduce path.
    x3 = jax.random.normal(k2, (2, 4, 300), dtype=jnp.float32)
    got_mid = argmax_pallas(x3, dim=1, block_cols=128)
    jax.block_until_ready(got_mid)
    assert bool(jnp.all(got_mid == jnp.argmax(x3, axis=1).astype(jnp.int32)))

    print("KERNEL_OK")
</pallas_src>

<mosaic_0001>
module attributes {stable_mosaic.version = 11 : i64} {
  func.func @_argmax_sublane_kernel(%arg0: i32, %arg1: i32, %arg2: memref<1x4x256xf32, #tpu.memory_space<vmem>>, %arg3: memref<1x1x256xi32, #tpu.memory_space<vmem>>) attributes {dimension_semantics = [#tpu.dimension_semantics<parallel>, #tpu.dimension_semantics<parallel>], iteration_bounds = array<i64: 2, 1>, scalar_prefetch = 0 : i64, scratch_operands = 0 : i64, tpu.core_type = #tpu.core_type<tc>, window_params = [{transform_indices = @transform_0, window_bounds = array<i64: 1, 4, 256>}, {transform_indices = @transform_1, window_bounds = array<i64: 1, 1, 256>}]} {
    %c0 = arith.constant 0 : index
    %c0_0 = arith.constant 0 : index
    %c0_1 = arith.constant 0 : index
    %0 = vector.load %arg2[%c0, %c0_0, %c0_1] : memref<1x4x256xf32, #tpu.memory_space<vmem>>, vector<1x4x256xf32>
    %cst = arith.constant dense<0xFF800000> : vector<1x256xf32>
    %1 = vector.multi_reduction <maximumf>, %0, %cst [1] : vector<1x4x256xf32> to vector<1x256xf32>
    %2 = vector.shape_cast %1 : vector<1x256xf32> to vector<1x1x256xf32>
    %3 = tpu.iota {dimensions = array<i32: 1>} : vector<1x4x256xi32>
    %4 = vector.broadcast %2 : vector<1x1x256xf32> to vector<1x4x256xf32>
    %5 = arith.cmpf oeq, %0, %4 : vector<1x4x256xf32>
    %c4_i32 = arith.constant 4 : i32
    %6 = vector.broadcast %c4_i32 : i32 to vector<1x4x256xi32>
    %7 = arith.select %5, %3, %6 : vector<1x4x256xi1>, vector<1x4x256xi32>
    %cst_2 = arith.constant dense<2147483647> : vector<1x256xi32>
    %8 = vector.multi_reduction <minsi>, %7, %cst_2 [1] : vector<1x4x256xi32> to vector<1x256xi32>
    %9 = vector.shape_cast %8 : vector<1x256xi32> to vector<1x1x256xi32>
    %c0_3 = arith.constant 0 : index
    %c0_4 = arith.constant 0 : index
    %c0_5 = arith.constant 0 : index
    %10 = vector.load %arg3[%c0_3, %c0_4, %c0_5] : memref<1x1x256xi32, #tpu.memory_space<vmem>>, vector<1x1x256xi32>
    tpu.vector_store %arg3[%c0_3, %c0_4, %c0_5], %9 {strides = array<i32>} : memref<1x1x256xi32, #tpu.memory_space<vmem>>, vector<1x1x256xi32>,
    return
  }
  func.func @transform_0(%arg0: i32, %arg1: i32) -> (i32, i32, i32) {
    %c0_i32 = arith.constant 0 : i32
    %c0_i32_0 = arith.constant 0 : i32
    return %arg0, %c0_i32, %arg1 : i32, i32, i32
  }
  func.func @transform_1(%arg0: i32, %arg1: i32) -> (i32, i32, i32) {
    %c0_i32 = arith.constant 0 : i32
    %c0_i32_0 = arith.constant 0 : i32
    return %arg0, %c0_i32, %arg1 : i32, i32, i32
  }
}

</mosaic_0001>

<llo_original>
// kernel: tpu_custom_call.1
$region0: #{tpu_custom_call.1}
  #allocation0 [shape = 'u32[]', space=smem, size = 0x4, offset = 0x4, fixed_abs, tag = 'smem constant byte address 0x4 - core index']
  #allocation1 [shape = 'u32[144,128]{1,0:T(1,128)}', space=vmem, size = 0x12000, scoped, tag = 'internal scratch']
  %s0 = inlined_call_operand.hbm [shape: f32[2,4,256], index: 0, kind: input, shape index: {}]
  %s1 = inlined_call_operand.hbm [shape: s32[2,1,256], index: 1, kind: output, shape index: {}]
  %s2 = sld [smem:[#allocation0]]
  $region41: #{tpu_custom_call.1} parent=0
    _
  %s4 = ssub.s32 1, %s2
  %s5 = scalar_select 0, %s4, %s2
  $region1: #{tpu_custom_call.1} parent=0
    #allocation2 [shape = 'u8[8192]{0}', space=vmem, size = 0x2000, scoped, tag = 'input window, operand 0']
    #allocation3 [shape = 's32[2]{0}', space=sflag, size = 0x8, scoped, tag = 'scoped memory for tpu_custom_call.1']
    #allocation4 [shape = 's32[2]{0}', space=sflag, size = 0x8, scoped, tag = 'scoped memory for tpu_custom_call.1']
    #allocation5 [shape = 'u8[2048]{0}', space=vmem, size = 0x800, scoped, tag = 'output window, operand 0']
    %6 = vsyncpa [#allocation3], 0
    %s7 = scalar_lea.sflag [#allocation3], 1
    %8 = vsyncpa %s7, 0
    %9 = vsyncpa [#allocation4], 0
    %s10 = scalar_lea.sflag [#allocation4], 1
    %11 = vsyncpa %s10, 0
    loop: start=0, step=1, limit=4
    $region2: #{tpu_custom_call.1} parent=1 // loop_pre_header
      _
    $region3: #{tpu_custom_call.1} parent=1 // loop_header
      %s13 = sphi 0, %s17
      %p14 = scmp.ge.s32.totalorder %s13, 4
      %s20 = sphi 0, %s32
      %s21 = sphi 0, %s28
      %s22 = sphi 0, %s20
      %s23 = sphi 0, %s21
      %s24 = sphi 0, %s22
      %s25 = sphi 0, %s23
      %s37 = sphi 0, %s39
      %s40 = sphi 0, %s37
      %s41 = sphi 0, %s40
      %s57 = sphi 0, %s41
      %s65 = sphi 0, %s67
      %s68 = sphi 0, %s65
      %s69 = sphi 0, %s68
      %s85 = sphi 0, %s69
    $region4: #{tpu_custom_call.1} parent=1 // loop_header_branch
      %16 = sbr.rel (%p14) target = $region8
    $region5: #{tpu_custom_call.1} parent=1 // loop_body
      %s18 = ssub.s32 %s13, 1
      %s19 = ssub.s32 %s13, 2
      %s26 = sadd.s32 1, %s21
      %p27 = scmp.ge.s32.totalorder %s26, 1
      %s28 = scalar_select %p27, 0, %s26
      %s29 = sadd.s32 1, %s20
      %s30 = scalar_select %p27, %s29, %s20
      %p31 = scmp.ge.s32.totalorder %s30, 2
      %s32 = scalar_select %p31, 0, %s30
      %s33 = ssub.s32 %s20, %s32
      %s34 = ssub.s32 %s21, %s28
      %s35 = sor.u32 %s33, %s34
      %p36 = scmp.eq.s32.totalorder %s35, 0
      %s38 = sadd.s32 %s37, 1
      %s39 = scalar_select %p36, %s37, %s38
      %p42 = pneg %p36
      %p43 = scmp.eq.s32.totalorder %s13, 1
      %p44 = por %p42, %p43
      %p45 = scmp.ne.s32.totalorder %s37, %s40
      %p46 = scmp.eq.s32.totalorder %s13, 0
      %p47 = por %p45, %p46
      %p48 = scmp.ne.s32.totalorder %s37, %s40
      %p49 = scmp.eq.s32.totalorder %s18, 1
      %p50 = por %p48, %p49
      %p51 = scmp.ne.s32.totalorder %s40, %s41
      %p52 = scmp.eq.s32.totalorder %s18, 0
      %p53 = por %p51, %p52
      %p54 = scmp.ne.s32.totalorder %s40, %s41
      %p55 = scmp.eq.s32.totalorder %s19, 1
      %p56 = por %p54, %p55
      %p58 = scmp.ne.s32.totalorder %s41, %s57
      %p59 = scmp.eq.s32.totalorder %s19, 0
      %p60 = por %p58, %p59
      %s61 = ssub.s32 %s20, %s32
      %s62 = ssub.s32 %s21, %s28
      %s63 = sor.u32 %s61, %s62
      %p64 = scmp.eq.s32.totalorder %s63, 0
      %s66 = sadd.s32 %s65, 1
      %s67 = scalar_select %p64, %s65, %s66
      %p70 = pneg %p64
      %p71 = scmp.eq.s32.totalorder %s13, 1
      %p72 = por %p70, %p71
      %p73 = scmp.ne.s32.totalorder %s65, %s68
      %p74 = scmp.eq.s32.totalorder %s13, 0
      %p75 = por %p73, %p74
      %p76 = scmp.ne.s32.totalorder %s65, %s68
      %p77 = scmp.eq.s32.totalorder %s18, 1
      %p78 = por %p76, %p77
      %p79 = scmp.ne.s32.totalorder %s68, %s69
      %p80 = scmp.eq.s32.totalorder %s18, 0
      %p81 = por %p79, %p80
      %p82 = scmp.ne.s32.totalorder %s68, %s69
      %p83 = scmp.eq.s32.totalorder %s19, 1
      %p84 = por %p82, %p83
      %p86 = scmp.ne.s32.totalorder %s69, %s85
      %p87 = scmp.eq.s32.totalorder %s19, 0
      %p88 = por %p86, %p87
      %p89 = scmp.le.s32.totalorder 1, %s13
      %p90 = scmp.lt.s32.totalorder %s13, 3
      %p91 = pnand %p89, %p90
      %p92 = pneg %p91
      // Predicated region
      $region9: #{tpu_custom_call.1} parent=5 // pred_check
        _
      $region10: #{tpu_custom_call.1} parent=5 // pred_check_branch
        %94 = sbr.rel (%p91) target = $region12
      $region11: #{tpu_custom_call.1} parent=5 // pred_region
        %s95 = ssub.s32 %s13, 1
      $region12: #{tpu_custom_call.1} parent=5 // pred_fallthru
        _
      %p96 = scmp.lt.s32.totalorder %s13, 2
      // Predicated region
      $region13: #{tpu_custom_call.1} parent=5 // pred_check
        %p97 = pneg %p96
      $region14: #{tpu_custom_call.1} parent=5 // pred_check_branch
        %99 = sbr.rel (%p97) target = $region16
      $region15: #{tpu_custom_call.1} parent=5 // pred_region
        // Predicated region
        $region17: #{tpu_custom_call.1} parent=15 // pred_check
          %p100 = pneg %p47
        $region18: #{tpu_custom_call.1} parent=15 // pred_check_branch
          %102 = sbr.rel (%p100) target = $region20
        $region19: #{tpu_custom_call.1} parent=15 // pred_region
          %s103 = sand.u32 %s37, 1
          %s104 = scalar_lea.sflag [#allocation3], %s103
          %s105 = sand.u32 %s37, 1
          %s106 = smul.addr %s105, 8
          %s107 = scalar_lea.vmem [#allocation2], %s106
          %s108 = smul.u32 2, %s21
          %s110 = ssub.s32 128, 128
          %111 = vsyncadd %s104, %s110
          %s112 = smul.addr %s20, 2
          %s113 = sadd.s32 %s108, %s112
          %s114 = smul.addr %s113, 64
          %s115 = scalar_lea.hbm %s0, %s114
          %s117 = sshll.u32 %s107, 4
          %s118 = int_to_ptr.vmem [resolvable:$true] %s117
          %120 = dma.hbm_to_vmem [thread:$0]  %s115, 128, %s118, %s104
        $region20: #{tpu_custom_call.1} parent=15 // pred_fallthru
          _
      $region16: #{tpu_custom_call.1} parent=5 // pred_fallthru
        _
      %p121 = scmp.le.s32.totalorder 1, %s13
      %p122 = scmp.lt.s32.totalorder %s13, 3
      %p123 = pnand %p121, %p122
      %p124 = pneg %p123
      // Predicated region
      $region21: #{tpu_custom_call.1} parent=5 // pred_check
        _
      $region22: #{tpu_custom_call.1} parent=5 // pred_check_branch
        %126 = sbr.rel (%p123) target = $region24
      $region23: #{tpu_custom_call.1} parent=5 // pred_region
        %s127 = ssub.s32 %s13, 1
        %s128 = sand.u32 %s40, 1
        %s129 = scalar_lea.sflag [#allocation3], %s128
        %s130 = sand.u32 %s40, 1
        %s131 = smul.addr %s130, 8
        %s132 = scalar_lea.vmem [#allocation2], %s131
        // Predicated region
        $region25: #{tpu_custom_call.1} parent=23 // pred_check
          %p133 = pneg %p53
        $region26: #{tpu_custom_call.1} parent=23 // pred_check_branch
          %135 = sbr.rel (%p133) target = $region28
        $region27: #{tpu_custom_call.1} parent=23 // pred_region
          %136 = dma.done %s129, 128
        $region28: #{tpu_custom_call.1} parent=23 // pred_fallthru
          _
        %s137 = sand.u32 %s40, 1
        %s138 = scalar_lea.sflag [#allocation3], %s137
        %s139 = sand.u32 %s40, 1
        %s140 = smul.addr %s139, 8
        %s141 = scalar_lea.vmem [#allocation2], %s140
        %p142 = pneg %p53
        %p143 = pneg %p50
        %p144 = pneg %p81
        %p145 = pneg %p78
        %s146 = sand.u32 %s68, 1
        %s147 = scalar_lea.sflag [#allocation4], %s146
        %s148 = sand.u32 %s68, 1
        %s149 = smul.addr %s148, 2
        %s150 = scalar_lea.vmem [#allocation5], %s149
        %s151 = smul.u32 2, %s23
        %s152 = smul.u32 2, %s23
        %v153 = vld [vmem:[%s132] sm:$0xff]
        %v155 = vcombine.high %v153, %v153
        %vm157 = vcmask 1043456
        %v158 = vsel %vm157, %v153, -inf
        %v159 = vrot.slane %v158, 4
        %v160 = vmax.f32 %v158, %v159
        %v161 = vrot.slane %v160, 2
        %v162 = vmax.f32 %v160, %v161
        %v163 = vrot.slane %v162, 1
        %v164 = vmax.f32 %v162, %v163
        %v165 = vsel %vm157, %v155, -inf
        %v166 = vrot.slane %v165, 4
        %v167 = vmax.f32 %v165, %v166
        %v168 = vrot.slane %v167, 2
        %v169 = vmax.f32 %v167, %v168
        %v170 = vrot.slane %v169, 1
        %v171 = vmax.f32 %v169, %v170
        %v172 = vlaneseq
        %v173 = vshrl.u32 %v172, 7
        %v176 = vcombine.low %v164, %v171
        %vm178 = vcmp.eq.f32.partialorder %v153, %v176
        %v180 = vunpack.c.l.s4 839922192
        %v181 = vunpack.c.0.s8 %v180
        %v182 = vlaneseq
        %v183 = vshrl.u32 %v182, 7
        %v184 = vsub.s32 %v181, %v183
        %v185 = vrot.slane %v173, %v184
        %v186 = vsel %vm178, %v185, 4
        %v187 = vcombine.high %v186, %v186
        %v188 = vsel %vm157, %v186, 2147483647
        %v189 = vrot.slane %v188, 4
        %vm190 = vcmp.lt.s32.totalorder %v188, %v189
        %v191 = vsel %vm190, %v188, %v189
        %v192 = vrot.slane %v191, 2
        %vm193 = vcmp.lt.s32.totalorder %v191, %v192
        %v194 = vsel %vm193, %v191, %v192
        %v195 = vrot.slane %v194, 1
        %vm196 = vcmp.lt.s32.totalorder %v194, %v195
        %v197 = vsel %vm196, %v194, %v195
        %v198 = vsel %vm157, %v187, 2147483647
        %v199 = vrot.slane %v198, 4
        %vm200 = vcmp.lt.s32.totalorder %v198, %v199
        %v201 = vsel %vm200, %v198, %v199
        %v202 = vrot.slane %v201, 2
        %vm203 = vcmp.lt.s32.totalorder %v201, %v202
        %v204 = vsel %vm203, %v201, %v202
        %v205 = vrot.slane %v204, 1
        %vm206 = vcmp.lt.s32.totalorder %v204, %v205
        %v207 = vsel %vm206, %v204, %v205
        %v208 = vcombine.low %v197, %v207
        %v210 = vunpack.c.l.s4 1966171168
        %v211 = vunpack.c.0.s8 %v210
        %v212 = vlaneseq
        %v213 = vshrl.u32 %v212, 7
        %v214 = vsub.s32 %v211, %v213
        %v215 = vrot.slane %v208, %v214
        %v217 = vunpack.c.l.s4 1966171168
        %v218 = vunpack.c.0.s8 %v217
        %v219 = vlaneseq
        %v220 = vshrl.u32 %v219, 7
        %v221 = vsub.s32 %v218, %v220
        %v222 = vrot.slane %v215, %v221
        %v223 = vlaneseq
        %vm224 = vcmp.ge.s32.totalorder %v223, 0
        %vm225 = vcmp.lt.s32.totalorder %v223, 256
        %vm226 = vmand %vm224, %vm225
        %227 = vst.msk [vmem:[%s150] sm:$0x3] %vm226, %v222
        %s228 = sand.u32 %s68, 1
        %s229 = scalar_lea.sflag [#allocation4], %s228
        %s230 = sand.u32 %s68, 1
        %s231 = smul.addr %s230, 2
        %s232 = scalar_lea.vmem [#allocation5], %s231
        // Predicated region
        $region29: #{tpu_custom_call.1} parent=23 // pred_check
          %p233 = pneg %p78
        $region30: #{tpu_custom_call.1} parent=23 // pred_check_branch
          %235 = sbr.rel (%p233) target = $region32
        $region31: #{tpu_custom_call.1} parent=23 // pred_region
          %s236 = smul.u32 2, %s23
          %s238 = ssub.s32 32, 32
          %239 = vsyncadd %s229, %s238
          %s240 = smul.addr %s22, 2
          %s241 = sadd.s32 %s236, %s240
          %s242 = smul.addr %s241, 16
          %s243 = scalar_lea.hbm %s1, %s242
          %s245 = sshll.u32 %s232, 4
          %s246 = int_to_ptr.vmem [resolvable:$true] %s245
          %248 = dma.vmem_to_hbm [thread:$0]  %s246, 32, %s243, %s229
        $region32: #{tpu_custom_call.1} parent=23 // pred_fallthru
          _
      $region24: #{tpu_custom_call.1} parent=5 // pred_fallthru
        _
      %p249 = scmp.le.s32.totalorder 2, %s13
      // Predicated region
      $region33: #{tpu_custom_call.1} parent=5 // pred_check
        %p250 = pneg %p249
      $region34: #{tpu_custom_call.1} parent=5 // pred_check_branch
        %252 = sbr.rel (%p250) target = $region36
      $region35: #{tpu_custom_call.1} parent=5 // pred_region
        %s253 = ssub.s32 %s13, 2
        // Predicated region
        $region37: #{tpu_custom_call.1} parent=35 // pred_check
          %p254 = pneg %p84
        $region38: #{tpu_custom_call.1} parent=35 // pred_check_branch
          %256 = sbr.rel (%p254) target = $region40
        $region39: #{tpu_custom_call.1} parent=35 // pred_region
          %s257 = sand.u32 %s69, 1
          %s258 = scalar_lea.sflag [#allocation4], %s257
          %s259 = sand.u32 %s69, 1
          %s260 = smul.addr %s259, 2
          %s261 = scalar_lea.vmem [#allocation5], %s260
          %262 = dma.done %s258, 32
        $region40: #{tpu_custom_call.1} parent=35 // pred_fallthru
          _
      $region36: #{tpu_custom_call.1} parent=5 // pred_fallthru
        _
    $region6: #{tpu_custom_call.1} parent=1 // loop_footer
      %s17 = sadd.s32 1, %s13
    $region7: #{tpu_custom_call.1} parent=1 // loop_footer_branch
      %12 = sbr.rel target = $region3
    $region8: #{tpu_custom_call.1} parent=1 // loop_exit
      _
    %263 = vsyncpa [#allocation3], 1
    %s264 = scalar_lea.sflag [#allocation3], 1
    %265 = vsyncpa %s264, 1
    %266 = vsyncpa [#allocation4], 1
    %s267 = scalar_lea.sflag [#allocation4], 1
    %268 = vsyncpa %s267, 1

</llo_original>
